<compile_context>
chip_gen: v7x
topology: tpu7x:2x2x1
jax: 0.10.0
libtpu: 0.0.40
codegen_flags: <defaults>
</compile_context>

<pallas_src>
import jax
import jax.numpy as jnp
from jax.experimental import pallas as pl
from jax.experimental.pallas import tpu as pltpu

# Module hyperparameters (from the PyTorch module).
BATCH_SIZE = 1
HIDDEN_SIZE = 4
INPUT_SIZE = 4
NUM_LAYERS = 2
SEQ_LEN = 5


def rnn_kernel(x_ref, h0_ref, wih_t_ref, whh_t_ref, bias_ref, out_ref):
    """Elman RNN: h_t = tanh(x_t W_ih^T + b_ih + h_{t-1} W_hh^T + b_hh).

    Refs (all resident in VMEM, single block, no grid):
      x_ref     : (seq_len*batch, input_size)   flattened input sequence
      h0_ref    : (num_layers, batch, hidden)
      wih_t_ref : (num_layers, input_size, hidden)   pre-transposed W_ih
      whh_t_ref : (num_layers, hidden, hidden)       pre-transposed W_hh
      bias_ref  : (num_layers, 1, hidden)            b_ih + b_hh (pre-summed)
      out_ref   : (seq_len*batch, hidden)            last layer's outputs
    """
    num_layers = h0_ref.shape[0]
    batch = h0_ref.shape[1]
    seq_len = x_ref.shape[0] // batch

    # Current layer's input slab, (seq_len*batch, in_dim).
    layer_in = x_ref[...]

    for l in range(num_layers):
        w_ih_t = wih_t_ref[l]        # (in_dim, hidden), already transposed
        w_hh_t = whh_t_ref[l]        # (hidden, hidden), already transposed
        bias = bias_ref[l]           # (1, hidden) -> broadcasts over rows
        h = h0_ref[l]                # (batch, hidden)

        # Hoisted input projection for all timesteps at once: one
        # (S*B, in) x (in, H) matmul per layer instead of S tiny ones in the
        # serial chain.  Bias is folded here too.
        x_proj = (
            jnp.dot(layer_in, w_ih_t, preferred_element_type=jnp.float32)
            + bias
        )  # (S*B, H)

        # Serial recurrence: only one dot + tanh per step remains.
        outs = []
        for t in range(seq_len):
            pre = x_proj[t * batch:(t + 1) * batch, :] + jnp.dot(
                h, w_hh_t, preferred_element_type=jnp.float32
            )
            h = jnp.tanh(pre)
            outs.append(h)

        # Next layer consumes this layer's stacked outputs.
        layer_in = jnp.concatenate(outs, axis=0)  # (S*B, H)

    # Single stacked store (already in the .view() layout).
    out_ref[...] = layer_in.astype(out_ref.dtype)


def rnn_forward(x, h0, w_ih, w_hh, b_ih, b_hh):
    """Wrapper: layout plumbing (transpose / bias fold / flatten) + pallas_call."""
    seq_len, batch, in_dim = x.shape
    hidden = h0.shape[-1]

    # Pure layout plumbing at the call boundary (not per-step compute):
    x2d = x.reshape(seq_len * batch, in_dim)          # fold the view up front
    wih_t = jnp.swapaxes(w_ih, -1, -2)                # (L, in_dim, hidden)
    whh_t = jnp.swapaxes(w_hh, -1, -2)                # (L, hidden, hidden)
    bias = b_ih + b_hh                                # (L, 1, hidden)

    vmem_spec = pl.BlockSpec(memory_space=pltpu.MemorySpace.VMEM)
    out = pl.pallas_call(
        rnn_kernel,
        out_shape=jax.ShapeDtypeStruct((seq_len * batch, hidden), x.dtype),
        in_specs=[vmem_spec] * 5,
        out_specs=vmem_spec,
    )(x2d, h0, wih_t, whh_t, bias)

    # Output is already (seq_len * batch, hidden); nothing left to reshape.
    return out


def rnn_reference(x, h0, w_ih, w_hh, b_ih, b_hh):
    """Pure-JAX reference of torch.nn.RNN (tanh, batch_first=False)."""
    seq_len = x.shape[0]
    layer_in = x
    for l in range(w_ih.shape[0]):
        h = h0[l]
        outs = []
        for t in range(seq_len):
            h = jnp.tanh(layer_in[t] @ w_ih[l].T + b_ih[l]
                         + h @ w_hh[l].T + b_hh[l])
            outs.append(h)
        layer_in = jnp.stack(outs, axis=0)
    return layer_in.reshape(seq_len * x.shape[1], h0.shape[-1])


if __name__ == "__main__":
    key = jax.random.PRNGKey(0)
    keys = jax.random.split(key, 6)

    # Deterministic parameter init (PyTorch-style uniform(-1/sqrt(H), 1/sqrt(H))).
    bound = 1.0 / jnp.sqrt(jnp.float32(HIDDEN_SIZE))
    # input_size == hidden_size, so both layers' W_ih stack cleanly.
    w_ih = jax.random.uniform(keys[0], (NUM_LAYERS, HIDDEN_SIZE, INPUT_SIZE),
                              jnp.float32, -bound, bound)
    w_hh = jax.random.uniform(keys[1], (NUM_LAYERS, HIDDEN_SIZE, HIDDEN_SIZE),
                              jnp.float32, -bound, bound)
    b_ih = jax.random.uniform(keys[2], (NUM_LAYERS, 1, HIDDEN_SIZE),
                              jnp.float32, -bound, bound)
    b_hh = jax.random.uniform(keys[3], (NUM_LAYERS, 1, HIDDEN_SIZE),
                              jnp.float32, -bound, bound)

    # Example inputs consistent with the module's forward().
    x = jax.random.normal(keys[4], (SEQ_LEN, BATCH_SIZE, INPUT_SIZE), jnp.float32)
    # Model.init_hidden() returns zeros.
    h0 = jnp.zeros((NUM_LAYERS, BATCH_SIZE, HIDDEN_SIZE), jnp.float32)

    out = rnn_forward(x, h0, w_ih, w_hh, b_ih, b_hh)
    out = jax.block_until_ready(out)

    ref = rnn_reference(x, h0, w_ih=w_ih, w_hh=w_hh, b_ih=b_ih, b_hh=b_hh)
    assert out.shape == (SEQ_LEN * BATCH_SIZE, HIDDEN_SIZE), out.shape
    assert jnp.allclose(out, ref, atol=1e-5, rtol=1e-5), "mismatch vs reference"

    print("KERNEL_OK")
</pallas_src>

<mosaic_0001>
module attributes {stable_mosaic.version = 11 : i64} {
  func.func @rnn_kernel(%arg0: memref<5x4xf32, #tpu.memory_space<vmem>>, %arg1: memref<2x1x4xf32, #tpu.memory_space<vmem>>, %arg2: memref<2x4x4xf32, #tpu.memory_space<vmem>>, %arg3: memref<2x4x4xf32, #tpu.memory_space<vmem>>, %arg4: memref<2x1x4xf32, #tpu.memory_space<vmem>>, %arg5: memref<5x4xf32, #tpu.memory_space<vmem>>) attributes {dimension_semantics = [], scalar_prefetch = 0 : i64, scratch_operands = 0 : i64, tpu.core_type = #tpu.core_type<tc>} {
    %c0 = arith.constant 0 : index
    %c0_0 = arith.constant 0 : index
    %0 = vector.load %arg0[%c0, %c0_0] : memref<5x4xf32, #tpu.memory_space<vmem>>, vector<5x4xf32>
    %c0_1 = arith.constant 0 : index
    %c0_2 = arith.constant 0 : index
    %c0_3 = arith.constant 0 : index
    %1 = vector.load %arg2[%c0_1, %c0_2, %c0_3] : memref<2x4x4xf32, #tpu.memory_space<vmem>>, vector<1x4x4xf32>
    %2 = vector.shape_cast %1 : vector<1x4x4xf32> to vector<4x4xf32>
    %c0_4 = arith.constant 0 : index
    %c0_5 = arith.constant 0 : index
    %c0_6 = arith.constant 0 : index
    %3 = vector.load %arg3[%c0_4, %c0_5, %c0_6] : memref<2x4x4xf32, #tpu.memory_space<vmem>>, vector<1x4x4xf32>
    %4 = vector.shape_cast %3 : vector<1x4x4xf32> to vector<4x4xf32>
    %c0_7 = arith.constant 0 : index
    %c0_8 = arith.constant 0 : index
    %c0_9 = arith.constant 0 : index
    %5 = vector.load %arg4[%c0_7, %c0_8, %c0_9] : memref<2x1x4xf32, #tpu.memory_space<vmem>>, vector<1x1x4xf32>
    %6 = vector.shape_cast %5 : vector<1x1x4xf32> to vector<1x4xf32>
    %c0_10 = arith.constant 0 : index
    %c0_11 = arith.constant 0 : index
    %c0_12 = arith.constant 0 : index
    %7 = vector.load %arg1[%c0_10, %c0_11, %c0_12] : memref<2x1x4xf32, #tpu.memory_space<vmem>>, vector<1x1x4xf32>
    %8 = vector.shape_cast %7 : vector<1x1x4xf32> to vector<1x4xf32>
    %cst = arith.constant dense<0.000000e+00> : vector<5x4xf32>
    %9 = tpu.matmul %0, %2, %cst {dimension_numbers = #tpu.dot_dimension_numbers<[1], [0], [0], [1], [0, 0, 1, 1], [], []>} : vector<5x4xf32>, vector<4x4xf32>, vector<5x4xf32> -> vector<5x4xf32>
    %10 = vector.broadcast %6 : vector<1x4xf32> to vector<5x4xf32>
    %11 = arith.addf %9, %10 : vector<5x4xf32>
    %12 = vector.extract_strided_slice %11 {offsets = [0, 0], sizes = [1, 4], strides = [1, 1]} : vector<5x4xf32> to vector<1x4xf32>
    %cst_13 = arith.constant dense<0.000000e+00> : vector<1x4xf32>
    %13 = tpu.matmul %8, %4, %cst_13 {dimension_numbers = #tpu.dot_dimension_numbers<[1], [0], [0], [1], [0, 0, 1, 1], [], []>} : vector<1x4xf32>, vector<4x4xf32>, vector<1x4xf32> -> vector<1x4xf32>
    %14 = arith.addf %12, %13 : vector<1x4xf32>
    %15 = math.tanh %14 : vector<1x4xf32>
    %16 = vector.extract_strided_slice %11 {offsets = [1, 0], sizes = [1, 4], strides = [1, 1]} : vector<5x4xf32> to vector<1x4xf32>
    %cst_14 = arith.constant dense<0.000000e+00> : vector<1x4xf32>
    %17 = tpu.matmul %15, %4, %cst_14 {dimension_numbers = #tpu.dot_dimension_numbers<[1], [0], [0], [1], [0, 0, 1, 1], [], []>} : vector<1x4xf32>, vector<4x4xf32>, vector<1x4xf32> -> vector<1x4xf32>
    %18 = arith.addf %16, %17 : vector<1x4xf32>
    %19 = math.tanh %18 : vector<1x4xf32>
    %20 = vector.extract_strided_slice %11 {offsets = [2, 0], sizes = [1, 4], strides = [1, 1]} : vector<5x4xf32> to vector<1x4xf32>
    %cst_15 = arith.constant dense<0.000000e+00> : vector<1x4xf32>
    %21 = tpu.matmul %19, %4, %cst_15 {dimension_numbers = #tpu.dot_dimension_numbers<[1], [0], [0], [1], [0, 0, 1, 1], [], []>} : vector<1x4xf32>, vector<4x4xf32>, vector<1x4xf32> -> vector<1x4xf32>
    %22 = arith.addf %20, %21 : vector<1x4xf32>
    %23 = math.tanh %22 : vector<1x4xf32>
    %24 = vector.extract_strided_slice %11 {offsets = [3, 0], sizes = [1, 4], strides = [1, 1]} : vector<5x4xf32> to vector<1x4xf32>
    %cst_16 = arith.constant dense<0.000000e+00> : vector<1x4xf32>
    %25 = tpu.matmul %23, %4, %cst_16 {dimension_numbers = #tpu.dot_dimension_numbers<[1], [0], [0], [1], [0, 0, 1, 1], [], []>} : vector<1x4xf32>, vector<4x4xf32>, vector<1x4xf32> -> vector<1x4xf32>
    %26 = arith.addf %24, %25 : vector<1x4xf32>
    %27 = math.tanh %26 : vector<1x4xf32>
    %28 = vector.extract_strided_slice %11 {offsets = [4, 0], sizes = [1, 4], strides = [1, 1]} : vector<5x4xf32> to vector<1x4xf32>
    %cst_17 = arith.constant dense<0.000000e+00> : vector<1x4xf32>
    %29 = tpu.matmul %27, %4, %cst_17 {dimension_numbers = #tpu.dot_dimension_numbers<[1], [0], [0], [1], [0, 0, 1, 1], [], []>} : vector<1x4xf32>, vector<4x4xf32>, vector<1x4xf32> -> vector<1x4xf32>
    %30 = arith.addf %28, %29 : vector<1x4xf32>
    %31 = math.tanh %30 : vector<1x4xf32>
    %32 = tpu.concatenate %15, %19, %23, %27, %31 in 0 : vector<1x4xf32>, vector<1x4xf32>, vector<1x4xf32>, vector<1x4xf32>, vector<1x4xf32> -> vector<5x4xf32>
    %c1 = arith.constant 1 : index
    %c0_18 = arith.constant 0 : index
    %c0_19 = arith.constant 0 : index
    %33 = vector.load %arg2[%c1, %c0_18, %c0_19] : memref<2x4x4xf32, #tpu.memory_space<vmem>>, vector<1x4x4xf32>
    %34 = vector.shape_cast %33 : vector<1x4x4xf32> to vector<4x4xf32>
    %c1_20 = arith.constant 1 : index
    %c0_21 = arith.constant 0 : index
    %c0_22 = arith.constant 0 : index
    %35 = vector.load %arg3[%c1_20, %c0_21, %c0_22] : memref<2x4x4xf32, #tpu.memory_space<vmem>>, vector<1x4x4xf32>
    %36 = vector.shape_cast %35 : vector<1x4x4xf32> to vector<4x4xf32>
    %c1_23 = arith.constant 1 : index
    %c0_24 = arith.constant 0 : index
    %c0_25 = arith.constant 0 : index
    %37 = vector.load %arg4[%c1_23, %c0_24, %c0_25] : memref<2x1x4xf32, #tpu.memory_space<vmem>>, vector<1x1x4xf32>
    %38 = vector.shape_cast %37 : vector<1x1x4xf32> to vector<1x4xf32>
    %c1_26 = arith.constant 1 : index
    %c0_27 = arith.constant 0 : index
    %c0_28 = arith.constant 0 : index
    %39 = vector.load %arg1[%c1_26, %c0_27, %c0_28] : memref<2x1x4xf32, #tpu.memory_space<vmem>>, vector<1x1x4xf32>
    %40 = vector.shape_cast %39 : vector<1x1x4xf32> to vector<1x4xf32>
    %cst_29 = arith.constant dense<0.000000e+00> : vector<5x4xf32>
    %41 = tpu.matmul %32, %34, %cst_29 {dimension_numbers = #tpu.dot_dimension_numbers<[1], [0], [0], [1], [0, 0, 1, 1], [], []>} : vector<5x4xf32>, vector<4x4xf32>, vector<5x4xf32> -> vector<5x4xf32>
    %42 = vector.broadcast %38 : vector<1x4xf32> to vector<5x4xf32>
    %43 = arith.addf %41, %42 : vector<5x4xf32>
    %44 = vector.extract_strided_slice %43 {offsets = [0, 0], sizes = [1, 4], strides = [1, 1]} : vector<5x4xf32> to vector<1x4xf32>
    %cst_30 = arith.constant dense<0.000000e+00> : vector<1x4xf32>
    %45 = tpu.matmul %40, %36, %cst_30 {dimension_numbers = #tpu.dot_dimension_numbers<[1], [0], [0], [1], [0, 0, 1, 1], [], []>} : vector<1x4xf32>, vector<4x4xf32>, vector<1x4xf32> -> vector<1x4xf32>
    %46 = arith.addf %44, %45 : vector<1x4xf32>
    %47 = math.tanh %46 : vector<1x4xf32>
    %48 = vector.extract_strided_slice %43 {offsets = [1, 0], sizes = [1, 4], strides = [1, 1]} : vector<5x4xf32> to vector<1x4xf32>
    %cst_31 = arith.constant dense<0.000000e+00> : vector<1x4xf32>
    %49 = tpu.matmul %47, %36, %cst_31 {dimension_numbers = #tpu.dot_dimension_numbers<[1], [0], [0], [1], [0, 0, 1, 1], [], []>} : vector<1x4xf32>, vector<4x4xf32>, vector<1x4xf32> -> vector<1x4xf32>
    %50 = arith.addf %48, %49 : vector<1x4xf32>
    %51 = math.tanh %50 : vector<1x4xf32>
    %52 = vector.extract_strided_slice %43 {offsets = [2, 0], sizes = [1, 4], strides = [1, 1]} : vector<5x4xf32> to vector<1x4xf32>
    %cst_32 = arith.constant dense<0.000000e+00> : vector<1x4xf32>
    %53 = tpu.matmul %51, %36, %cst_32 {dimension_numbers = #tpu.dot_dimension_numbers<[1], [0], [0], [1], [0, 0, 1, 1], [], []>} : vector<1x4xf32>, vector<4x4xf32>, vector<1x4xf32> -> vector<1x4xf32>
    %54 = arith.addf %52, %53 : vector<1x4xf32>
    %55 = math.tanh %54 : vector<1x4xf32>
    %56 = vector.extract_strided_slice %43 {offsets = [3, 0], sizes = [1, 4], strides = [1, 1]} : vector<5x4xf32> to vector<1x4xf32>
    %cst_33 = arith.constant dense<0.000000e+00> : vector<1x4xf32>
    %57 = tpu.matmul %55, %36, %cst_33 {dimension_numbers = #tpu.dot_dimension_numbers<[1], [0], [0], [1], [0, 0, 1, 1], [], []>} : vector<1x4xf32>, vector<4x4xf32>, vector<1x4xf32> -> vector<1x4xf32>
    %58 = arith.addf %56, %57 : vector<1x4xf32>
    %59 = math.tanh %58 : vector<1x4xf32>
    %60 = vector.extract_strided_slice %43 {offsets = [4, 0], sizes = [1, 4], strides = [1, 1]} : vector<5x4xf32> to vector<1x4xf32>
    %cst_34 = arith.constant dense<0.000000e+00> : vector<1x4xf32>
    %61 = tpu.matmul %59, %36, %cst_34 {dimension_numbers = #tpu.dot_dimension_numbers<[1], [0], [0], [1], [0, 0, 1, 1], [], []>} : vector<1x4xf32>, vector<4x4xf32>, vector<1x4xf32> -> vector<1x4xf32>
    %62 = arith.addf %60, %61 : vector<1x4xf32>
    %63 = math.tanh %62 : vector<1x4xf32>
    %64 = tpu.concatenate %47, %51, %55, %59, %63 in 0 : vector<1x4xf32>, vector<1x4xf32>, vector<1x4xf32>, vector<1x4xf32>, vector<1x4xf32> -> vector<5x4xf32>
    %c0_35 = arith.constant 0 : index
    %c0_36 = arith.constant 0 : index
    %65 = vector.load %arg5[%c0_35, %c0_36] : memref<5x4xf32, #tpu.memory_space<vmem>>, vector<5x4xf32>
    tpu.vector_store %arg5[%c0_35, %c0_36], %64 {strides = array<i32>} : memref<5x4xf32, #tpu.memory_space<vmem>>, vector<5x4xf32>,
    return
  }
}

</mosaic_0001>

<llo_original>
// kernel: tpu_custom_call.1
$region0: #{tpu_custom_call.1}
  #allocation0 [shape = 'u32[]', space=smem, size = 0x4, offset = 0x4, fixed_abs, tag = 'smem constant byte address 0x4 - core index']
  #allocation1 [shape = 'u32[144,128]{1,0:T(1,128)}', space=vmem, size = 0x12000, scoped, tag = 'internal scratch']
  %s0 = inlined_call_operand.vmem [shape: f32[5,4], index: 0, kind: input, shape index: {}]
  %s1 = inlined_call_operand.vmem [shape: f32[2,1,4], index: 1, kind: input, shape index: {}]
  %s2 = inlined_call_operand.vmem [shape: f32[2,4,4], index: 2, kind: input, shape index: {}]
  %s3 = inlined_call_operand.vmem [shape: f32[2,4,4], index: 3, kind: input, shape index: {}]
  %s4 = inlined_call_operand.vmem [shape: f32[2,1,4], index: 4, kind: input, shape index: {}]
  %s5 = inlined_call_operand.vmem [shape: f32[5,4], index: 5, kind: output, shape index: {}]
  %s6 = sld [smem:[#allocation0]]
  $region30: #{tpu_custom_call.1} parent=0
    _
  %s8 = ssub.s32 1, %s6
  %s9 = scalar_select 0, %s8, %s6
  // Predicated region
  $region2: #{tpu_custom_call.1} parent=0 // pred_check
    _
  $region3: #{tpu_custom_call.1} parent=0 // pred_check_branch
    %11 = sbr.rel (0) target = $region5
  $region4: #{tpu_custom_call.1} parent=0 // pred_region
    _
  $region5: #{tpu_custom_call.1} parent=0 // pred_fallthru
    _
  // Predicated region
  $region6: #{tpu_custom_call.1} parent=0 // pred_check
    _
  $region7: #{tpu_custom_call.1} parent=0 // pred_check_branch
    %13 = sbr.rel (0) target = $region9
  $region8: #{tpu_custom_call.1} parent=0 // pred_region
    _
  $region9: #{tpu_custom_call.1} parent=0 // pred_fallthru
    _
  // Predicated region
  $region10: #{tpu_custom_call.1} parent=0 // pred_check
    _
  $region11: #{tpu_custom_call.1} parent=0 // pred_check_branch
    %15 = sbr.rel (0) target = $region13
  $region12: #{tpu_custom_call.1} parent=0 // pred_region
    _
  $region13: #{tpu_custom_call.1} parent=0 // pred_fallthru
    _
  // Predicated region
  $region14: #{tpu_custom_call.1} parent=0 // pred_check
    _
  $region15: #{tpu_custom_call.1} parent=0 // pred_check_branch
    %17 = sbr.rel (0) target = $region17
  $region16: #{tpu_custom_call.1} parent=0 // pred_region
    _
  $region17: #{tpu_custom_call.1} parent=0 // pred_fallthru
    _
  // Predicated region
  $region18: #{tpu_custom_call.1} parent=0 // pred_check
    _
  $region19: #{tpu_custom_call.1} parent=0 // pred_check_branch
    %19 = sbr.rel (0) target = $region21
  $region20: #{tpu_custom_call.1} parent=0 // pred_region
    _
  $region21: #{tpu_custom_call.1} parent=0 // pred_fallthru
    _
  %v20 = vld [vmem:[%s0] sm:$0x1f]
  %v21 = vld [vmem:[%s2] sm:$0xf]
  %v22 = vld [vmem:[%s3] sm:$0xf]
  %v23 = vld [vmem:[%s4] sm:$0x1]
  %v24 = vld [vmem:[%s1] sm:$0x1]
  %v26 = vlaneseq
  %v27 = vshrl.u32 %v26, 7
  %v28 = vsub.s32 0, %v27
  %v29 = vrot.slane %v23, %v28
  %vm31 = vcmask 31744
  %v33 = vsel %vm31, %v20, 0
  %vm35 = vcmask 1043456
  %v37 = vsel %vm35, %v21, 0
  %39 = vmatprep.subr.mxu0 0.0
  %40 = vmatpush1.msra.mxu0 %v37
  %41 = vmatprep.subr.mxu0 0.0
  %42 = vmatpush1.msra.mxu0 0.0
  %43 = vmatprep.subr.mxu0 0.0
  %44 = vmatpush1.msra.mxu0 0.0
  %45 = vmatprep.subr.mxu0 0.0
  %46 = vmatpush1.msra.mxu0 0.0
  %47 = vmatprep.subr.mxu0 0.0
  %48 = vmatpush1.msra.mxu0 0.0
  %49 = vmatprep.subr.mxu0 0.0
  %50 = vmatpush1.msra.mxu0 0.0
  %51 = vmatprep.subr.mxu0 0.0
  %52 = vmatpush1.msra.mxu0 0.0
  %53 = vmatprep.subr.mxu0 0.0
  %54 = vmatpush1.msra.mxu0 0.0
  %55 = vmatprep.subr.mxu0 0.0
  %56 = vmatpush1.msra.mxu0 0.0
  %57 = vmatprep.subr.mxu0 0.0
  %58 = vmatpush1.msra.mxu0 0.0
  %59 = vmatprep.subr.mxu0 0.0
  %60 = vmatpush1.msra.mxu0 0.0
  %61 = vmatprep.subr.mxu0 0.0
  %62 = vmatpush1.msra.mxu0 0.0
  %63 = vmatprep.subr.mxu0 0.0
  %64 = vmatpush1.msra.mxu0 0.0
  %65 = vmatprep.subr.mxu0 0.0
  %66 = vmatpush1.msra.mxu0 0.0
  %67 = vmatprep.subr.mxu0 0.0
  %68 = vmatpush1.msra.mxu0 0.0
  %69 = vmatprep.subr.mxu0 0.0
  %70 = vmatpush1.msra.mxu0 0.0
  %71 = vmatprep.subr.mxu0 0.0
  %72 = vmatpush1.msra.mxu0 0.0
  %73 = vmatprep.subr.mxu0 0.0
  %74 = vmatpush1.msra.mxu0 0.0
  %75 = vmatprep.subr.mxu0 0.0
  %76 = vmatpush1.msra.mxu0 0.0
  %77 = vmatprep.subr.mxu0 0.0
  %78 = vmatpush1.msra.mxu0 0.0
  %79 = vmatprep.subr.mxu0 0.0
  %80 = vmatpush1.msra.mxu0 0.0
  %81 = vmatprep.subr.mxu0 0.0
  %82 = vmatpush1.msra.mxu0 0.0
  %83 = vmatprep.subr.mxu0 0.0
  %84 = vmatpush1.msra.mxu0 0.0
  %85 = vmatprep.subr.mxu0 0.0
  %86 = vmatpush1.msra.mxu0 0.0
  %87 = vmatprep.subr.mxu0 0.0
  %88 = vmatpush1.msra.mxu0 0.0
  %89 = vmatprep.subr.mxu0 0.0
  %90 = vmatpush1.msra.mxu0 0.0
  %91 = vmatprep.subr.mxu0 0.0
  %92 = vmatpush1.msra.mxu0 0.0
  %93 = vmatprep.subr.mxu0 0.0
  %94 = vmatpush1.msra.mxu0 0.0
  %95 = vmatprep.subr.mxu0 0.0
  %96 = vmatpush1.msra.mxu0 0.0
  %97 = vmatprep.subr.mxu0 0.0
  %98 = vmatpush1.msra.mxu0 0.0
  %99 = vmatprep.subr.mxu0 0.0
  %100 = vmatpush1.msra.mxu0 0.0
  %101 = vmatprep.subr.mxu0 0.0
  %102 = vmatpush1.msra.mxu0 0.0
  %103 = vmatprep.mubr.f32.mxu0 0.0
  %104 = vmatmul.mubr.f32.gmra.mrb[0].mxu0 %v33
  %v105 = vpop.f32.mrb[0].mxu0
  %v106 = vadd.f32 %v29, %v105
  %v107 = vpop.f32.mrb[0].mxu0
  %108 = vdwg.mxu0
  %v110 = vsel %vm31, %v24, 0
  %v113 = vsel %vm35, %v22, 0
  %115 = vmatprep.subr.mxu0 0.0
  %116 = vmatpush1.msra.mxu0 %v113
  %117 = vmatprep.subr.mxu0 0.0
  %118 = vmatpush1.msra.mxu0 0.0
  %119 = vmatprep.subr.mxu0 0.0
  %120 = vmatpush1.msra.mxu0 0.0
  %121 = vmatprep.subr.mxu0 0.0
  %122 = vmatpush1.msra.mxu0 0.0
  %123 = vmatprep.subr.mxu0 0.0
  %124 = vmatpush1.msra.mxu0 0.0
  %125 = vmatprep.subr.mxu0 0.0
  %126 = vmatpush1.msra.mxu0 0.0
  %127 = vmatprep.subr.mxu0 0.0
  %128 = vmatpush1.msra.mxu0 0.0
  %129 = vmatprep.subr.mxu0 0.0
  %130 = vmatpush1.msra.mxu0 0.0
  %131 = vmatprep.subr.mxu0 0.0
  %132 = vmatpush1.msra.mxu0 0.0
  %133 = vmatprep.subr.mxu0 0.0
  %134 = vmatpush1.msra.mxu0 0.0
  %135 = vmatprep.subr.mxu0 0.0
  %136 = vmatpush1.msra.mxu0 0.0
  %137 = vmatprep.subr.mxu0 0.0
  %138 = vmatpush1.msra.mxu0 0.0
  %139 = vmatprep.subr.mxu0 0.0
  %140 = vmatpush1.msra.mxu0 0.0
  %141 = vmatprep.subr.mxu0 0.0
  %142 = vmatpush1.msra.mxu0 0.0
  %143 = vmatprep.subr.mxu0 0.0
  %144 = vmatpush1.msra.mxu0 0.0
  %145 = vmatprep.subr.mxu0 0.0
  %146 = vmatpush1.msra.mxu0 0.0
  %147 = vmatprep.subr.mxu0 0.0
  %148 = vmatpush1.msra.mxu0 0.0
  %149 = vmatprep.subr.mxu0 0.0
  %150 = vmatpush1.msra.mxu0 0.0
  %151 = vmatprep.subr.mxu0 0.0
  %152 = vmatpush1.msra.mxu0 0.0
  %153 = vmatprep.subr.mxu0 0.0
  %154 = vmatpush1.msra.mxu0 0.0
  %155 = vmatprep.subr.mxu0 0.0
  %156 = vmatpush1.msra.mxu0 0.0
  %157 = vmatprep.subr.mxu0 0.0
  %158 = vmatpush1.msra.mxu0 0.0
  %159 = vmatprep.subr.mxu0 0.0
  %160 = vmatpush1.msra.mxu0 0.0
  %161 = vmatprep.subr.mxu0 0.0
  %162 = vmatpush1.msra.mxu0 0.0
  %163 = vmatprep.subr.mxu0 0.0
  %164 = vmatpush1.msra.mxu0 0.0
  %165 = vmatprep.subr.mxu0 0.0
  %166 = vmatpush1.msra.mxu0 0.0
  %167 = vmatprep.subr.mxu0 0.0
  %168 = vmatpush1.msra.mxu0 0.0
  %169 = vmatprep.subr.mxu0 0.0
  %170 = vmatpush1.msra.mxu0 0.0
  %171 = vmatprep.subr.mxu0 0.0
  %172 = vmatpush1.msra.mxu0 0.0
  %173 = vmatprep.subr.mxu0 0.0
  %174 = vmatpush1.msra.mxu0 0.0
  %175 = vmatprep.subr.mxu0 0.0
  %176 = vmatpush1.msra.mxu0 0.0
  %177 = vmatprep.subr.mxu0 0.0
  %178 = vmatpush1.msra.mxu0 0.0
  %179 = vmatprep.mubr.f32.mxu0 0.0
  %180 = vmatmul.mubr.f32.gmra.mrb[0].mxu0 %v110
  %v181 = vpop.f32.mrb[0].mxu0
  %v182 = vadd.f32 0.0, %v181
  %v183 = vpop.f32.mrb[0].mxu0
  %184 = vdwg.mxu0
  %v185 = vadd.f32 %v106, %v182
  %v186 = vtanh.pop %v185
  %v188 = vsel %vm31, %v186, 0
  %190 = vmatprep.subr.mxu0 0.0
  %191 = vmatpush1.msra.mxu0 %v113
  %192 = vmatprep.subr.mxu0 0.0
  %193 = vmatpush1.msra.mxu0 0.0
  %194 = vmatprep.subr.mxu0 0.0
  %195 = vmatpush1.msra.mxu0 0.0
  %196 = vmatprep.subr.mxu0 0.0
  %197 = vmatpush1.msra.mxu0 0.0
  %198 = vmatprep.subr.mxu0 0.0
  %199 = vmatpush1.msra.mxu0 0.0
  %200 = vmatprep.subr.mxu0 0.0
  %201 = vmatpush1.msra.mxu0 0.0
  %202 = vmatprep.subr.mxu0 0.0
  %203 = vmatpush1.msra.mxu0 0.0
  %204 = vmatprep.subr.mxu0 0.0
  %205 = vmatpush1.msra.mxu0 0.0
  %206 = vmatprep.subr.mxu0 0.0
  %207 = vmatpush1.msra.mxu0 0.0
  %208 = vmatprep.subr.mxu0 0.0
  %209 = vmatpush1.msra.mxu0 0.0
  %210 = vmatprep.subr.mxu0 0.0
  %211 = vmatpush1.msra.mxu0 0.0
  %212 = vmatprep.subr.mxu0 0.0
  %213 = vmatpush1.msra.mxu0 0.0
  %214 = vmatprep.subr.mxu0 0.0
  %215 = vmatpush1.msra.mxu0 0.0
  %216 = vmatprep.subr.mxu0 0.0
  %217 = vmatpush1.msra.mxu0 0.0
  %218 = vmatprep.subr.mxu0 0.0
  %219 = vmatpush1.msra.mxu0 0.0
  %220 = vmatprep.subr.mxu0 0.0
  %221 = vmatpush1.msra.mxu0 0.0
  %222 = vmatprep.subr.mxu0 0.0
  %223 = vmatpush1.msra.mxu0 0.0
  %224 = vmatprep.subr.mxu0 0.0
  %225 = vmatpush1.msra.mxu0 0.0
  %226 = vmatprep.subr.mxu0 0.0
  %227 = vmatpush1.msra.mxu0 0.0
  %228 = vmatprep.subr.mxu0 0.0
  %229 = vmatpush1.msra.mxu0 0.0
  %230 = vmatprep.subr.mxu0 0.0
  %231 = vmatpush1.msra.mxu0 0.0
  %232 = vmatprep.subr.mxu0 0.0
  %233 = vmatpush1.msra.mxu0 0.0
  %234 = vmatprep.subr.mxu0 0.0
  %235 = vmatpush1.msra.mxu0 0.0
  %236 = vmatprep.subr.mxu0 0.0
  %237 = vmatpush1.msra.mxu0 0.0
  %238 = vmatprep.subr.mxu0 0.0
  %239 = vmatpush1.msra.mxu0 0.0
  %240 = vmatprep.subr.mxu0 0.0
  %241 = vmatpush1.msra.mxu0 0.0
  %242 = vmatprep.subr.mxu0 0.0
  %243 = vmatpush1.msra.mxu0 0.0
  %244 = vmatprep.subr.mxu0 0.0
  %245 = vmatpush1.msra.mxu0 0.0
  %246 = vmatprep.subr.mxu0 0.0
  %247 = vmatpush1.msra.mxu0 0.0
  %248 = vmatprep.subr.mxu0 0.0
  %249 = vmatpush1.msra.mxu0 0.0
  %250 = vmatprep.subr.mxu0 0.0
  %251 = vmatpush1.msra.mxu0 0.0
  %252 = vmatprep.subr.mxu0 0.0
  %253 = vmatpush1.msra.mxu0 0.0
  %254 = vmatprep.mubr.f32.mxu0 0.0
  %255 = vmatmul.mubr.f32.gmra.mrb[0].mxu0 %v188
  %v256 = vpop.f32.mrb[0].mxu0
  %v257 = vadd.f32 0.0, %v256
  %v258 = vpop.f32.mrb[0].mxu0
  %259 = vdwg.mxu0
  %v261 = vrot.slane %v257, 7
  %v263 = vadd.f32 %v106, %v261
  %v264 = vtanh.pop %v263
  %v266 = vrot.slane %v264, 1
  %v267 = vsel %vm31, %v266, 0
  %269 = vmatprep.subr.mxu0 0.0
  %270 = vmatpush1.msra.mxu0 %v113
  %271 = vmatprep.subr.mxu0 0.0
  %272 = vmatpush1.msra.mxu0 0.0
  %273 = vmatprep.subr.mxu0 0.0
  %274 = vmatpush1.msra.mxu0 0.0
  %275 = vmatprep.subr.mxu0 0.0
  %276 = vmatpush1.msra.mxu0 0.0
  %277 = vmatprep.subr.mxu0 0.0
  %278 = vmatpush1.msra.mxu0 0.0
  %279 = vmatprep.subr.mxu0 0.0
  %280 = vmatpush1.msra.mxu0 0.0
  %281 = vmatprep.subr.mxu0 0.0
  %282 = vmatpush1.msra.mxu0 0.0
  %283 = vmatprep.subr.mxu0 0.0
  %284 = vmatpush1.msra.mxu0 0.0
  %285 = vmatprep.subr.mxu0 0.0
  %286 = vmatpush1.msra.mxu0 0.0
  %287 = vmatprep.subr.mxu0 0.0
  %288 = vmatpush1.msra.mxu0 0.0
  %289 = vmatprep.subr.mxu0 0.0
  %290 = vmatpush1.msra.mxu0 0.0
  %291 = vmatprep.subr.mxu0 0.0
  %292 = vmatpush1.msra.mxu0 0.0
  %293 = vmatprep.subr.mxu0 0.0
  %294 = vmatpush1.msra.mxu0 0.0
  %295 = vmatprep.subr.mxu0 0.0
  %296 = vmatpush1.msra.mxu0 0.0
  %297 = vmatprep.subr.mxu0 0.0
  %298 = vmatpush1.msra.mxu0 0.0
  %299 = vmatprep.subr.mxu0 0.0
  %300 = vmatpush1.msra.mxu0 0.0
  %301 = vmatprep.subr.mxu0 0.0
  %302 = vmatpush1.msra.mxu0 0.0
  %303 = vmatprep.subr.mxu0 0.0
  %304 = vmatpush1.msra.mxu0 0.0
  %305 = vmatprep.subr.mxu0 0.0
  %306 = vmatpush1.msra.mxu0 0.0
  %307 = vmatprep.subr.mxu0 0.0
  %308 = vmatpush1.msra.mxu0 0.0
  %309 = vmatprep.subr.mxu0 0.0
  %310 = vmatpush1.msra.mxu0 0.0
  %311 = vmatprep.subr.mxu0 0.0
  %312 = vmatpush1.msra.mxu0 0.0
  %313 = vmatprep.subr.mxu0 0.0
  %314 = vmatpush1.msra.mxu0 0.0
  %315 = vmatprep.subr.mxu0 0.0
  %316 = vmatpush1.msra.mxu0 0.0
  %317 = vmatprep.subr.mxu0 0.0
  %318 = vmatpush1.msra.mxu0 0.0
  %319 = vmatprep.subr.mxu0 0.0
  %320 = vmatpush1.msra.mxu0 0.0
  %321 = vmatprep.subr.mxu0 0.0
  %322 = vmatpush1.msra.mxu0 0.0
  %323 = vmatprep.subr.mxu0 0.0
  %324 = vmatpush1.msra.mxu0 0.0
  %325 = vmatprep.subr.mxu0 0.0
  %326 = vmatpush1.msra.mxu0 0.0
  %327 = vmatprep.subr.mxu0 0.0
  %328 = vmatpush1.msra.mxu0 0.0
  %329 = vmatprep.subr.mxu0 0.0
  %330 = vmatpush1.msra.mxu0 0.0
  %331 = vmatprep.subr.mxu0 0.0
  %332 = vmatpush1.msra.mxu0 0.0
  %333 = vmatprep.mubr.f32.mxu0 0.0
  %334 = vmatmul.mubr.f32.gmra.mrb[0].mxu0 %v267
  %v335 = vpop.f32.mrb[0].mxu0
  %v336 = vadd.f32 0.0, %v335
  %v337 = vpop.f32.mrb[0].mxu0
  %338 = vdwg.mxu0
  %v340 = vrot.slane %v336, 6
  %v342 = vadd.f32 %v106, %v340
  %v343 = vtanh.pop %v342
  %v345 = vrot.slane %v343, 2
  %v346 = vsel %vm31, %v345, 0
  %348 = vmatprep.subr.mxu0 0.0
  %349 = vmatpush1.msra.mxu0 %v113
  %350 = vmatprep.subr.mxu0 0.0
  %351 = vmatpush1.msra.mxu0 0.0
  %352 = vmatprep.subr.mxu0 0.0
  %353 = vmatpush1.msra.mxu0 0.0
  %354 = vmatprep.subr.mxu0 0.0
  %355 = vmatpush1.msra.mxu0 0.0
  %356 = vmatprep.subr.mxu0 0.0
  %357 = vmatpush1.msra.mxu0 0.0
  %358 = vmatprep.subr.mxu0 0.0
  %359 = vmatpush1.msra.mxu0 0.0
  %360 = vmatprep.subr.mxu0 0.0
  %361 = vmatpush1.msra.mxu0 0.0
  %362 = vmatprep.subr.mxu0 0.0
  %363 = vmatpush1.msra.mxu0 0.0
  %364 = vmatprep.subr.mxu0 0.0
  %365 = vmatpush1.msra.mxu0 0.0
  %366 = vmatprep.subr.mxu0 0.0
  %367 = vmatpush1.msra.mxu0 0.0
  %368 = vmatprep.subr.mxu0 0.0
  %369 = vmatpush1.msra.mxu0 0.0
  %370 = vmatprep.subr.mxu0 0.0
  %371 = vmatpush1.msra.mxu0 0.0
  %372 = vmatprep.subr.mxu0 0.0
  %373 = vmatpush1.msra.mxu0 0.0
  %374 = vmatprep.subr.mxu0 0.0
  %375 = vmatpush1.msra.mxu0 0.0
  %376 = vmatprep.subr.mxu0 0.0
  %377 = vmatpush1.msra.mxu0 0.0
  %378 = vmatprep.subr.mxu0 0.0
  %379 = vmatpush1.msra.mxu0 0.0
  %380 = vmatprep.subr.mxu0 0.0
  %381 = vmatpush1.msra.mxu0 0.0
  %382 = vmatprep.subr.mxu0 0.0
  %383 = vmatpush1.msra.mxu0 0.0
  %384 = vmatprep.subr.mxu0 0.0
  %385 = vmatpush1.msra.mxu0 0.0
  %386 = vmatprep.subr.mxu0 0.0
  %387 = vmatpush1.msra.mxu0 0.0
  %388 = vmatprep.subr.mxu0 0.0
  %389 = vmatpush1.msra.mxu0 0.0
  %390 = vmatprep.subr.mxu0 0.0
  %391 = vmatpush1.msra.mxu0 0.0
  %392 = vmatprep.subr.mxu0 0.0
  %393 = vmatpush1.msra.mxu0 0.0
  %394 = vmatprep.subr.mxu0 0.0
  %395 = vmatpush1.msra.mxu0 0.0
  %396 = vmatprep.subr.mxu0 0.0
  %397 = vmatpush1.msra.mxu0 0.0
  %398 = vmatprep.subr.mxu0 0.0
  %399 = vmatpush1.msra.mxu0 0.0
  %400 = vmatprep.subr.mxu0 0.0
  %401 = vmatpush1.msra.mxu0 0.0
  %402 = vmatprep.subr.mxu0 0.0
  %403 = vmatpush1.msra.mxu0 0.0
  %404 = vmatprep.subr.mxu0 0.0
  %405 = vmatpush1.msra.mxu0 0.0
  %406 = vmatprep.subr.mxu0 0.0
  %407 = vmatpush1.msra.mxu0 0.0
  %408 = vmatprep.subr.mxu0 0.0
  %409 = vmatpush1.msra.mxu0 0.0
  %410 = vmatprep.subr.mxu0 0.0
  %411 = vmatpush1.msra.mxu0 0.0
  %412 = vmatprep.mubr.f32.mxu0 0.0
  %413 = vmatmul.mubr.f32.gmra.mrb[0].mxu0 %v346
  %v414 = vpop.f32.mrb[0].mxu0
  %v415 = vadd.f32 0.0, %v414
  %v416 = vpop.f32.mrb[0].mxu0
  %417 = vdwg.mxu0
  %v419 = vrot.slane %v415, 5
  %v421 = vadd.f32 %v106, %v419
  %v422 = vtanh.pop %v421
  %v424 = vrot.slane %v422, 3
  %v425 = vsel %vm31, %v424, 0
  %427 = vmatprep.subr.mxu0 0.0
  %428 = vmatpush1.msra.mxu0 %v113
  %429 = vmatprep.subr.mxu0 0.0
  %430 = vmatpush1.msra.mxu0 0.0
  %431 = vmatprep.subr.mxu0 0.0
  %432 = vmatpush1.msra.mxu0 0.0
  %433 = vmatprep.subr.mxu0 0.0
  %434 = vmatpush1.msra.mxu0 0.0
  %435 = vmatprep.subr.mxu0 0.0
  %436 = vmatpush1.msra.mxu0 0.0
  %437 = vmatprep.subr.mxu0 0.0
  %438 = vmatpush1.msra.mxu0 0.0
  %439 = vmatprep.subr.mxu0 0.0
  %440 = vmatpush1.msra.mxu0 0.0
  %441 = vmatprep.subr.mxu0 0.0
  %442 = vmatpush1.msra.mxu0 0.0
  %443 = vmatprep.subr.mxu0 0.0
  %444 = vmatpush1.msra.mxu0 0.0
  %445 = vmatprep.subr.mxu0 0.0
  %446 = vmatpush1.msra.mxu0 0.0
  %447 = vmatprep.subr.mxu0 0.0
  %448 = vmatpush1.msra.mxu0 0.0
  %449 = vmatprep.subr.mxu0 0.0
  %450 = vmatpush1.msra.mxu0 0.0
  %451 = vmatprep.subr.mxu0 0.0
  %452 = vmatpush1.msra.mxu0 0.0
  %453 = vmatprep.subr.mxu0 0.0
  %454 = vmatpush1.msra.mxu0 0.0
  %455 = vmatprep.subr.mxu0 0.0
  %456 = vmatpush1.msra.mxu0 0.0
  %457 = vmatprep.subr.mxu0 0.0
  %458 = vmatpush1.msra.mxu0 0.0
  %459 = vmatprep.subr.mxu0 0.0
  %460 = vmatpush1.msra.mxu0 0.0
  %461 = vmatprep.subr.mxu0 0.0
  %462 = vmatpush1.msra.mxu0 0.0
  %463 = vmatprep.subr.mxu0 0.0
  %464 = vmatpush1.msra.mxu0 0.0
  %465 = vmatprep.subr.mxu0 0.0
  %466 = vmatpush1.msra.mxu0 0.0
  %467 = vmatprep.subr.mxu0 0.0
  %468 = vmatpush1.msra.mxu0 0.0
  %469 = vmatprep.subr.mxu0 0.0
  %470 = vmatpush1.msra.mxu0 0.0
  %471 = vmatprep.subr.mxu0 0.0
  %472 = vmatpush1.msra.mxu0 0.0
  %473 = vmatprep.subr.mxu0 0.0
  %474 = vmatpush1.msra.mxu0 0.0
  %475 = vmatprep.subr.mxu0 0.0
  %476 = vmatpush1.msra.mxu0 0.0
  %477 = vmatprep.subr.mxu0 0.0
  %478 = vmatpush1.msra.mxu0 0.0
  %479 = vmatprep.subr.mxu0 0.0
  %480 = vmatpush1.msra.mxu0 0.0
  %481 = vmatprep.subr.mxu0 0.0
  %482 = vmatpush1.msra.mxu0 0.0
  %483 = vmatprep.subr.mxu0 0.0
  %484 = vmatpush1.msra.mxu0 0.0
  %485 = vmatprep.subr.mxu0 0.0
  %486 = vmatpush1.msra.mxu0 0.0
  %487 = vmatprep.subr.mxu0 0.0
  %488 = vmatpush1.msra.mxu0 0.0
  %489 = vmatprep.subr.mxu0 0.0
  %490 = vmatpush1.msra.mxu0 0.0
  %491 = vmatprep.mubr.f32.mxu0 0.0
  %492 = vmatmul.mubr.f32.gmra.mrb[0].mxu0 %v425
  %v493 = vpop.f32.mrb[0].mxu0
  %v494 = vadd.f32 0.0, %v493
  %v495 = vpop.f32.mrb[0].mxu0
  %496 = vdwg.mxu0
  %v498 = vrot.slane %v494, 4
  %v500 = vadd.f32 %v106, %v498
  %v501 = vtanh.pop %v500
  %vm502 = vcmask 1040384
  %v503 = vsel %vm502, %v186, %v264
  %vm504 = vcmask 1041408
  %v505 = vsel %vm504, %v503, %v343
  %vm506 = vcmask 1042432
  %v507 = vsel %vm506, %v505, %v422
  %v508 = vsel %vm35, %v507, %v501
  %s509 = scalar_lea.vmem %s2, 4
  %v510 = vld [vmem:[%s509] sm:$0xf]
  %s511 = scalar_lea.vmem %s3, 4
  %v512 = vld [vmem:[%s511] sm:$0xf]
  %s513 = scalar_lea.vmem %s4, 1
  %v514 = vld [vmem:[%s513] sm:$0x1]
  %s515 = scalar_lea.vmem %s1, 1
  %v516 = vld [vmem:[%s515] sm:$0x1]
  %v518 = vlaneseq
  %v519 = vshrl.u32 %v518, 7
  %v520 = vsub.s32 0, %v519
  %v521 = vrot.slane %v514, %v520
  %v524 = vsel %vm31, %v508, 0
  %v527 = vsel %vm35, %v510, 0
  %529 = vmatprep.subr.mxu0 0.0
  %530 = vmatpush1.msra.mxu0 %v527
  %531 = vmatprep.subr.mxu0 0.0
  %532 = vmatpush1.msra.mxu0 0.0
  %533 = vmatprep.subr.mxu0 0.0
  %534 = vmatpush1.msra.mxu0 0.0
  %535 = vmatprep.subr.mxu0 0.0
  %536 = vmatpush1.msra.mxu0 0.0
  %537 = vmatprep.subr.mxu0 0.0
  %538 = vmatpush1.msra.mxu0 0.0
  %539 = vmatprep.subr.mxu0 0.0
  %540 = vmatpush1.msra.mxu0 0.0
  %541 = vmatprep.subr.mxu0 0.0
  %542 = vmatpush1.msra.mxu0 0.0
  %543 = vmatprep.subr.mxu0 0.0
  %544 = vmatpush1.msra.mxu0 0.0
  %545 = vmatprep.subr.mxu0 0.0
  %546 = vmatpush1.msra.mxu0 0.0
  %547 = vmatprep.subr.mxu0 0.0
  %548 = vmatpush1.msra.mxu0 0.0
  %549 = vmatprep.subr.mxu0 0.0
  %550 = vmatpush1.msra.mxu0 0.0
  %551 = vmatprep.subr.mxu0 0.0
  %552 = vmatpush1.msra.mxu0 0.0
  %553 = vmatprep.subr.mxu0 0.0
  %554 = vmatpush1.msra.mxu0 0.0
  %555 = vmatprep.subr.mxu0 0.0
  %556 = vmatpush1.msra.mxu0 0.0
  %557 = vmatprep.subr.mxu0 0.0
  %558 = vmatpush1.msra.mxu0 0.0
  %559 = vmatprep.subr.mxu0 0.0
  %560 = vmatpush1.msra.mxu0 0.0
  %561 = vmatprep.subr.mxu0 0.0
  %562 = vmatpush1.msra.mxu0 0.0
  %563 = vmatprep.subr.mxu0 0.0
  %564 = vmatpush1.msra.mxu0 0.0
  %565 = vmatprep.subr.mxu0 0.0
  %566 = vmatpush1.msra.mxu0 0.0
  %567 = vmatprep.subr.mxu0 0.0
  %568 = vmatpush1.msra.mxu0 0.0
  %569 = vmatprep.subr.mxu0 0.0
  %570 = vmatpush1.msra.mxu0 0.0
  %571 = vmatprep.subr.mxu0 0.0
  %572 = vmatpush1.msra.mxu0 0.0
  %573 = vmatprep.subr.mxu0 0.0
  %574 = vmatpush1.msra.mxu0 0.0
  %575 = vmatprep.subr.mxu0 0.0
  %576 = vmatpush1.msra.mxu0 0.0
  %577 = vmatprep.subr.mxu0 0.0
  %578 = vmatpush1.msra.mxu0 0.0
  %579 = vmatprep.subr.mxu0 0.0
  %580 = vmatpush1.msra.mxu0 0.0
  %581 = vmatprep.subr.mxu0 0.0
  %582 = vmatpush1.msra.mxu0 0.0
  %583 = vmatprep.subr.mxu0 0.0
  %584 = vmatpush1.msra.mxu0 0.0
  %585 = vmatprep.subr.mxu0 0.0
  %586 = vmatpush1.msra.mxu0 0.0
  %587 = vmatprep.subr.mxu0 0.0
  %588 = vmatpush1.msra.mxu0 0.0
  %589 = vmatprep.subr.mxu0 0.0
  %590 = vmatpush1.msra.mxu0 0.0
  %591 = vmatprep.subr.mxu0 0.0
  %592 = vmatpush1.msra.mxu0 0.0
  %593 = vmatprep.mubr.f32.mxu0 0.0
  %594 = vmatmul.mubr.f32.gmra.mrb[0].mxu0 %v524
  %v595 = vpop.f32.mrb[0].mxu0
  %v596 = vadd.f32 %v521, %v595
  %v597 = vpop.f32.mrb[0].mxu0
  %598 = vdwg.mxu0
  %v600 = vsel %vm31, %v516, 0
  %v603 = vsel %vm35, %v512, 0
  %605 = vmatprep.subr.mxu0 0.0
  %606 = vmatpush1.msra.mxu0 %v603
  %607 = vmatprep.subr.mxu0 0.0
  %608 = vmatpush1.msra.mxu0 0.0
  %609 = vmatprep.subr.mxu0 0.0
  %610 = vmatpush1.msra.mxu0 0.0
  %611 = vmatprep.subr.mxu0 0.0
  %612 = vmatpush1.msra.mxu0 0.0
  %613 = vmatprep.subr.mxu0 0.0
  %614 = vmatpush1.msra.mxu0 0.0
  %615 = vmatprep.subr.mxu0 0.0
  %616 = vmatpush1.msra.mxu0 0.0
  %617 = vmatprep.subr.mxu0 0.0
  %618 = vmatpush1.msra.mxu0 0.0
  %619 = vmatprep.subr.mxu0 0.0
  %620 = vmatpush1.msra.mxu0 0.0
  %621 = vmatprep.subr.mxu0 0.0
  %622 = vmatpush1.msra.mxu0 0.0
  %623 = vmatprep.subr.mxu0 0.0
  %624 = vmatpush1.msra.mxu0 0.0
  %625 = vmatprep.subr.mxu0 0.0
  %626 = vmatpush1.msra.mxu0 0.0
  %627 = vmatprep.subr.mxu0 0.0
  %628 = vmatpush1.msra.mxu0 0.0
  %629 = vmatprep.subr.mxu0 0.0
  %630 = vmatpush1.msra.mxu0 0.0
  %631 = vmatprep.subr.mxu0 0.0
  %632 = vmatpush1.msra.mxu0 0.0
  %633 = vmatprep.subr.mxu0 0.0
  %634 = vmatpush1.msra.mxu0 0.0
  %635 = vmatprep.subr.mxu0 0.0
  %636 = vmatpush1.msra.mxu0 0.0
  %637 = vmatprep.subr.mxu0 0.0
  %638 = vmatpush1.msra.mxu0 0.0
  %639 = vmatprep.subr.mxu0 0.0
  %640 = vmatpush1.msra.mxu0 0.0
  %641 = vmatprep.subr.mxu0 0.0
  %642 = vmatpush1.msra.mxu0 0.0
  %643 = vmatprep.subr.mxu0 0.0
  %644 = vmatpush1.msra.mxu0 0.0
  %645 = vmatprep.subr.mxu0 0.0
  %646 = vmatpush1.msra.mxu0 0.0
  %647 = vmatprep.subr.mxu0 0.0
  %648 = vmatpush1.msra.mxu0 0.0
  %649 = vmatprep.subr.mxu0 0.0
  %650 = vmatpush1.msra.mxu0 0.0
  %651 = vmatprep.subr.mxu0 0.0
  %652 = vmatpush1.msra.mxu0 0.0
  %653 = vmatprep.subr.mxu0 0.0
  %654 = vmatpush1.msra.mxu0 0.0
  %655 = vmatprep.subr.mxu0 0.0
  %656 = vmatpush1.msra.mxu0 0.0
  %657 = vmatprep.subr.mxu0 0.0
  %658 = vmatpush1.msra.mxu0 0.0
  %659 = vmatprep.subr.mxu0 0.0
  %660 = vmatpush1.msra.mxu0 0.0
  %661 = vmatprep.subr.mxu0 0.0
  %662 = vmatpush1.msra.mxu0 0.0
  %663 = vmatprep.subr.mxu0 0.0
  %664 = vmatpush1.msra.mxu0 0.0
  %665 = vmatprep.subr.mxu0 0.0
  %666 = vmatpush1.msra.mxu0 0.0
  %667 = vmatprep.subr.mxu0 0.0
  %668 = vmatpush1.msra.mxu0 0.0
  %669 = vmatprep.mubr.f32.mxu0 0.0
  %670 = vmatmul.mubr.f32.gmra.mrb[0].mxu0 %v600
  %v671 = vpop.f32.mrb[0].mxu0
  %v672 = vadd.f32 0.0, %v671
  %v673 = vpop.f32.mrb[0].mxu0
  %674 = vdwg.mxu0
  %v675 = vadd.f32 %v596, %v672
  %v676 = vtanh.pop %v675
  %v678 = vsel %vm31, %v676, 0
  %680 = vmatprep.subr.mxu0 0.0
  %681 = vmatpush1.msra.mxu0 %v603
  %682 = vmatprep.subr.mxu0 0.0
  %683 = vmatpush1.msra.mxu0 0.0
  %684 = vmatprep.subr.mxu0 0.0
  %685 = vmatpush1.msra.mxu0 0.0
  %686 = vmatprep.subr.mxu0 0.0
  %687 = vmatpush1.msra.mxu0 0.0
  %688 = vmatprep.subr.mxu0 0.0
  %689 = vmatpush1.msra.mxu0 0.0
  %690 = vmatprep.subr.mxu0 0.0
  %691 = vmatpush1.msra.mxu0 0.0
  %692 = vmatprep.subr.mxu0 0.0
  %693 = vmatpush1.msra.mxu0 0.0
  %694 = vmatprep.subr.mxu0 0.0
  %695 = vmatpush1.msra.mxu0 0.0
  %696 = vmatprep.subr.mxu0 0.0
  %697 = vmatpush1.msra.mxu0 0.0
  %698 = vmatprep.subr.mxu0 0.0
  %699 = vmatpush1.msra.mxu0 0.0
  %700 = vmatprep.subr.mxu0 0.0
  %701 = vmatpush1.msra.mxu0 0.0
  %702 = vmatprep.subr.mxu0 0.0
  %703 = vmatpush1.msra.mxu0 0.0
  %704 = vmatprep.subr.mxu0 0.0
  %705 = vmatpush1.msra.mxu0 0.0
  %706 = vmatprep.subr.mxu0 0.0
  %707 = vmatpush1.msra.mxu0 0.0
  %708 = vmatprep.subr.mxu0 0.0
  %709 = vmatpush1.msra.mxu0 0.0
  %710 = vmatprep.subr.mxu0 0.0
  %711 = vmatpush1.msra.mxu0 0.0
  %712 = vmatprep.subr.mxu0 0.0
  %713 = vmatpush1.msra.mxu0 0.0
  %714 = vmatprep.subr.mxu0 0.0
  %715 = vmatpush1.msra.mxu0 0.0
  %716 = vmatprep.subr.mxu0 0.0
  %717 = vmatpush1.msra.mxu0 0.0
  %718 = vmatprep.subr.mxu0 0.0
  %719 = vmatpush1.msra.mxu0 0.0
  %720 = vmatprep.subr.mxu0 0.0
  %721 = vmatpush1.msra.mxu0 0.0
  %722 = vmatprep.subr.mxu0 0.0
  %723 = vmatpush1.msra.mxu0 0.0
  %724 = vmatprep.subr.mxu0 0.0
  %725 = vmatpush1.msra.mxu0 0.0
  %726 = vmatprep.subr.mxu0 0.0
  %727 = vmatpush1.msra.mxu0 0.0
  %728 = vmatprep.subr.mxu0 0.0
  %729 = vmatpush1.msra.mxu0 0.0
  %730 = vmatprep.subr.mxu0 0.0
  %731 = vmatpush1.msra.mxu0 0.0
  %732 = vmatprep.subr.mxu0 0.0
  %733 = vmatpush1.msra.mxu0 0.0
  %734 = vmatprep.subr.mxu0 0.0
  %735 = vmatpush1.msra.mxu0 0.0
  %736 = vmatprep.subr.mxu0 0.0
  %737 = vmatpush1.msra.mxu0 0.0
  %738 = vmatprep.subr.mxu0 0.0
  %739 = vmatpush1.msra.mxu0 0.0
  %740 = vmatprep.subr.mxu0 0.0
  %741 = vmatpush1.msra.mxu0 0.0
  %742 = vmatprep.subr.mxu0 0.0
  %743 = vmatpush1.msra.mxu0 0.0
  %744 = vmatprep.mubr.f32.mxu0 0.0
  %745 = vmatmul.mubr.f32.gmra.mrb[0].mxu0 %v678
  %v746 = vpop.f32.mrb[0].mxu0
  %v747 = vadd.f32 0.0, %v746
  %v748 = vpop.f32.mrb[0].mxu0
  %749 = vdwg.mxu0
  %v751 = vrot.slane %v747, 7
  %v753 = vadd.f32 %v596, %v751
  %v754 = vtanh.pop %v753
  %v756 = vrot.slane %v754, 1
  %v757 = vsel %vm31, %v756, 0
  %759 = vmatprep.subr.mxu0 0.0
  %760 = vmatpush1.msra.mxu0 %v603
  %761 = vmatprep.subr.mxu0 0.0
  %762 = vmatpush1.msra.mxu0 0.0
  %763 = vmatprep.subr.mxu0 0.0
  %764 = vmatpush1.msra.mxu0 0.0
  %765 = vmatprep.subr.mxu0 0.0
  %766 = vmatpush1.msra.mxu0 0.0
  %767 = vmatprep.subr.mxu0 0.0
  %768 = vmatpush1.msra.mxu0 0.0
  %769 = vmatprep.subr.mxu0 0.0
  %770 = vmatpush1.msra.mxu0 0.0
  %771 = vmatprep.subr.mxu0 0.0
  %772 = vmatpush1.msra.mxu0 0.0
  %773 = vmatprep.subr.mxu0 0.0
  %774 = vmatpush1.msra.mxu0 0.0
  %775 = vmatprep.subr.mxu0 0.0
  %776 = vmatpush1.msra.mxu0 0.0
  %777 = vmatprep.subr.mxu0 0.0
  %778 = vmatpush1.msra.mxu0 0.0
  %779 = vmatprep.subr.mxu0 0.0
  %780 = vmatpush1.msra.mxu0 0.0
  %781 = vmatprep.subr.mxu0 0.0
  %782 = vmatpush1.msra.mxu0 0.0
  %783 = vmatprep.subr.mxu0 0.0
  %784 = vmatpush1.msra.mxu0 0.0
  %785 = vmatprep.subr.mxu0 0.0
  %786 = vmatpush1.msra.mxu0 0.0
  %787 = vmatprep.subr.mxu0 0.0
  %788 = vmatpush1.msra.mxu0 0.0
  %789 = vmatprep.subr.mxu0 0.0
  %790 = vmatpush1.msra.mxu0 0.0
  %791 = vmatprep.subr.mxu0 0.0
  %792 = vmatpush1.msra.mxu0 0.0
  %793 = vmatprep.subr.mxu0 0.0
  %794 = vmatpush1.msra.mxu0 0.0
  %795 = vmatprep.subr.mxu0 0.0
  %796 = vmatpush1.msra.mxu0 0.0
  %797 = vmatprep.subr.mxu0 0.0
  %798 = vmatpush1.msra.mxu0 0.0
  %799 = vmatprep.subr.mxu0 0.0
  %800 = vmatpush1.msra.mxu0 0.0
  %801 = vmatprep.subr.mxu0 0.0
  %802 = vmatpush1.msra.mxu0 0.0
  %803 = vmatprep.subr.mxu0 0.0
  %804 = vmatpush1.msra.mxu0 0.0
  %805 = vmatprep.subr.mxu0 0.0
  %806 = vmatpush1.msra.mxu0 0.0
  %807 = vmatprep.subr.mxu0 0.0
  %808 = vmatpush1.msra.mxu0 0.0
  %809 = vmatprep.subr.mxu0 0.0
  %810 = vmatpush1.msra.mxu0 0.0
  %811 = vmatprep.subr.mxu0 0.0
  %812 = vmatpush1.msra.mxu0 0.0
  %813 = vmatprep.subr.mxu0 0.0
  %814 = vmatpush1.msra.mxu0 0.0
  %815 = vmatprep.subr.mxu0 0.0
  %816 = vmatpush1.msra.mxu0 0.0
  %817 = vmatprep.subr.mxu0 0.0
  %818 = vmatpush1.msra.mxu0 0.0
  %819 = vmatprep.subr.mxu0 0.0
  %820 = vmatpush1.msra.mxu0 0.0
  %821 = vmatprep.subr.mxu0 0.0
  %822 = vmatpush1.msra.mxu0 0.0
  %823 = vmatprep.mubr.f32.mxu0 0.0
  %824 = vmatmul.mubr.f32.gmra.mrb[0].mxu0 %v757
  %v825 = vpop.f32.mrb[0].mxu0
  %v826 = vadd.f32 0.0, %v825
  %v827 = vpop.f32.mrb[0].mxu0
  %828 = vdwg.mxu0
  %v830 = vrot.slane %v826, 6
  %v832 = vadd.f32 %v596, %v830
  %v833 = vtanh.pop %v832
  %v835 = vrot.slane %v833, 2
  %v836 = vsel %vm31, %v835, 0
  %838 = vmatprep.subr.mxu0 0.0
  %839 = vmatpush1.msra.mxu0 %v603
  %840 = vmatprep.subr.mxu0 0.0
  %841 = vmatpush1.msra.mxu0 0.0
  %842 = vmatprep.subr.mxu0 0.0
  %843 = vmatpush1.msra.mxu0 0.0
  %844 = vmatprep.subr.mxu0 0.0
  %845 = vmatpush1.msra.mxu0 0.0
  %846 = vmatprep.subr.mxu0 0.0
  %847 = vmatpush1.msra.mxu0 0.0
  %848 = vmatprep.subr.mxu0 0.0
  %849 = vmatpush1.msra.mxu0 0.0
  %850 = vmatprep.subr.mxu0 0.0
  %851 = vmatpush1.msra.mxu0 0.0
  %852 = vmatprep.subr.mxu0 0.0
  %853 = vmatpush1.msra.mxu0 0.0
  %854 = vmatprep.subr.mxu0 0.0
  %855 = vmatpush1.msra.mxu0 0.0
  %856 = vmatprep.subr.mxu0 0.0
  %857 = vmatpush1.msra.mxu0 0.0
  %858 = vmatprep.subr.mxu0 0.0
  %859 = vmatpush1.msra.mxu0 0.0
  %860 = vmatprep.subr.mxu0 0.0
  %861 = vmatpush1.msra.mxu0 0.0
  %862 = vmatprep.subr.mxu0 0.0
  %863 = vmatpush1.msra.mxu0 0.0
  %864 = vmatprep.subr.mxu0 0.0
  %865 = vmatpush1.msra.mxu0 0.0
  %866 = vmatprep.subr.mxu0 0.0
  %867 = vmatpush1.msra.mxu0 0.0
  %868 = vmatprep.subr.mxu0 0.0
  %869 = vmatpush1.msra.mxu0 0.0
  %870 = vmatprep.subr.mxu0 0.0
  %871 = vmatpush1.msra.mxu0 0.0
  %872 = vmatprep.subr.mxu0 0.0
  %873 = vmatpush1.msra.mxu0 0.0
  %874 = vmatprep.subr.mxu0 0.0
  %875 = vmatpush1.msra.mxu0 0.0
  %876 = vmatprep.subr.mxu0 0.0
  %877 = vmatpush1.msra.mxu0 0.0
  %878 = vmatprep.subr.mxu0 0.0
  %879 = vmatpush1.msra.mxu0 0.0
  %880 = vmatprep.subr.mxu0 0.0
  %881 = vmatpush1.msra.mxu0 0.0
  %882 = vmatprep.subr.mxu0 0.0
  %883 = vmatpush1.msra.mxu0 0.0
  %884 = vmatprep.subr.mxu0 0.0
  %885 = vmatpush1.msra.mxu0 0.0
  %886 = vmatprep.subr.mxu0 0.0
  %887 = vmatpush1.msra.mxu0 0.0
  %888 = vmatprep.subr.mxu0 0.0
  %889 = vmatpush1.msra.mxu0 0.0
  %890 = vmatprep.subr.mxu0 0.0
  %891 = vmatpush1.msra.mxu0 0.0
  %892 = vmatprep.subr.mxu0 0.0
  %893 = vmatpush1.msra.mxu0 0.0
  %894 = vmatprep.subr.mxu0 0.0
  %895 = vmatpush1.msra.mxu0 0.0
  %896 = vmatprep.subr.mxu0 0.0
  %897 = vmatpush1.msra.mxu0 0.0
  %898 = vmatprep.subr.mxu0 0.0
  %899 = vmatpush1.msra.mxu0 0.0
  %900 = vmatprep.subr.mxu0 0.0
  %901 = vmatpush1.msra.mxu0 0.0
  %902 = vmatprep.mubr.f32.mxu0 0.0
  %903 = vmatmul.mubr.f32.gmra.mrb[0].mxu0 %v836
  %v904 = vpop.f32.mrb[0].mxu0
  %v905 = vadd.f32 0.0, %v904
  %v906 = vpop.f32.mrb[0].mxu0
  %907 = vdwg.mxu0
  %v909 = vrot.slane %v905, 5
  %v911 = vadd.f32 %v596, %v909
  %v912 = vtanh.pop %v911
  %v914 = vrot.slane %v912, 3
  %v915 = vsel %vm31, %v914, 0
  %917 = vmatprep.subr.mxu0 0.0
  %918 = vmatpush1.msra.mxu0 %v603
  %919 = vmatprep.subr.mxu0 0.0
  %920 = vmatpush1.msra.mxu0 0.0
  %921 = vmatprep.subr.mxu0 0.0
  %922 = vmatpush1.msra.mxu0 0.0
  %923 = vmatprep.subr.mxu0 0.0
  %924 = vmatpush1.msra.mxu0 0.0
  %925 = vmatprep.subr.mxu0 0.0
  %926 = vmatpush1.msra.mxu0 0.0
  %927 = vmatprep.subr.mxu0 0.0
  %928 = vmatpush1.msra.mxu0 0.0
  %929 = vmatprep.subr.mxu0 0.0
  %930 = vmatpush1.msra.mxu0 0.0
  %931 = vmatprep.subr.mxu0 0.0
  %932 = vmatpush1.msra.mxu0 0.0
  %933 = vmatprep.subr.mxu0 0.0
  %934 = vmatpush1.msra.mxu0 0.0
  %935 = vmatprep.subr.mxu0 0.0
  %936 = vmatpush1.msra.mxu0 0.0
  %937 = vmatprep.subr.mxu0 0.0
  %938 = vmatpush1.msra.mxu0 0.0
  %939 = vmatprep.subr.mxu0 0.0
  %940 = vmatpush1.msra.mxu0 0.0
  %941 = vmatprep.subr.mxu0 0.0
  %942 = vmatpush1.msra.mxu0 0.0
  %943 = vmatprep.subr.mxu0 0.0
  %944 = vmatpush1.msra.mxu0 0.0
  %945 = vmatprep.subr.mxu0 0.0
  %946 = vmatpush1.msra.mxu0 0.0
  %947 = vmatprep.subr.mxu0 0.0
  %948 = vmatpush1.msra.mxu0 0.0
  %949 = vmatprep.subr.mxu0 0.0
  %950 = vmatpush1.msra.mxu0 0.0
  %951 = vmatprep.subr.mxu0 0.0
  %952 = vmatpush1.msra.mxu0 0.0
  %953 = vmatprep.subr.mxu0 0.0
  %954 = vmatpush1.msra.mxu0 0.0
  %955 = vmatprep.subr.mxu0 0.0
  %956 = vmatpush1.msra.mxu0 0.0
  %957 = vmatprep.subr.mxu0 0.0
  %958 = vmatpush1.msra.mxu0 0.0
  %959 = vmatprep.subr.mxu0 0.0
  %960 = vmatpush1.msra.mxu0 0.0
  %961 = vmatprep.subr.mxu0 0.0
  %962 = vmatpush1.msra.mxu0 0.0
  %963 = vmatprep.subr.mxu0 0.0
  %964 = vmatpush1.msra.mxu0 0.0
  %965 = vmatprep.subr.mxu0 0.0
  %966 = vmatpush1.msra.mxu0 0.0
  %967 = vmatprep.subr.mxu0 0.0
  %968 = vmatpush1.msra.mxu0 0.0
  %969 = vmatprep.subr.mxu0 0.0
  %970 = vmatpush1.msra.mxu0 0.0
  %971 = vmatprep.subr.mxu0 0.0
  %972 = vmatpush1.msra.mxu0 0.0
  %973 = vmatprep.subr.mxu0 0.0
  %974 = vmatpush1.msra.mxu0 0.0
  %975 = vmatprep.subr.mxu0 0.0
  %976 = vmatpush1.msra.mxu0 0.0
  %977 = vmatprep.subr.mxu0 0.0
  %978 = vmatpush1.msra.mxu0 0.0
  %979 = vmatprep.subr.mxu0 0.0
  %980 = vmatpush1.msra.mxu0 0.0
  %981 = vmatprep.mubr.f32.mxu0 0.0
  %982 = vmatmul.mubr.f32.gmra.mrb[0].mxu0 %v915
  %v983 = vpop.f32.mrb[0].mxu0
  %v984 = vadd.f32 0.0, %v983
  %v985 = vpop.f32.mrb[0].mxu0
  %986 = vdwg.mxu0
  %v988 = vrot.slane %v984, 4
  %v990 = vadd.f32 %v596, %v988
  %v991 = vtanh.pop %v990
  %v992 = vsel %vm502, %v676, %v754
  %v993 = vsel %vm504, %v992, %v833
  %v994 = vsel %vm506, %v993, %v912
  %v995 = vsel %vm35, %v994, %v991
  %vm996 = vcmask 28672
  %997 = vst.msk [vmem:[%s5] sm:$0x1f] %vm996, %v995
  // Predicated region
  $region22: #{tpu_custom_call.1} parent=0 // pred_check
    _
  $region23: #{tpu_custom_call.1} parent=0 // pred_check_branch
    %999 = sbr.rel (0) target = $region25
  $region24: #{tpu_custom_call.1} parent=0 // pred_region
    _
  $region25: #{tpu_custom_call.1} parent=0 // pred_fallthru
    _
  // Predicated region
  $region26: #{tpu_custom_call.1} parent=0 // pred_check
    _
  $region27: #{tpu_custom_call.1} parent=0 // pred_check_branch
    %1001 = sbr.rel (0) target = $region29
  $region28: #{tpu_custom_call.1} parent=0 // pred_region
    _
  $region29: #{tpu_custom_call.1} parent=0 // pred_fallthru
    _

</llo_original>
